<compile_context>
chip_gen: v6e
topology: v6e:2x2x1
jax: 0.10.0
libtpu: 0.0.40
codegen_flags: <defaults>
</compile_context>

<pallas_src>
import jax
import jax.numpy as jnp
from jax.experimental import pallas as pl
from jax.experimental.pallas import tpu as pltpu


def rbf_network_kernel(xT_ref, cs_ref, a_ref, s_ref, w_ref, b_ref, o_ref):
    xT = xT_ref[...]                                              # [D, TB] (batch on lanes)

    # Squared norms of the batch points: cross-sublane reduce -> [1, TB] (XLU,
    # overlaps with the MXU matmul below).
    x2 = jnp.sum(xT * xT, axis=0, keepdims=True)                  # [1, TB]

    # MXU: pre-scaled centres [D, D] @ x^T [D, TB] -> [D, TB]; result already
    # carries the 2/sigma^2 factor, so no per-element rescale is needed.
    g = jnp.dot(cs_ref[...], xT, preferred_element_type=jnp.float32)

    # e = -||x - c||^2 / sigma^2 ; clamp at 0 (d2 >= 0) for numerical safety.
    e = jnp.minimum(g - s_ref[...] * x2 - a_ref[...], 0.0)        # [D, TB]

    # Gaussian basis on the EUP.
    phi = jnp.exp(e)                                              # [D, TB]

    # Dropout: identity (eval mode).
    # Linear head: VPU mul + sublane reduce (XLU) + SMEM scalar bias.
    out = jnp.sum(phi * w_ref[...], axis=0, keepdims=True) + b_ref[0, 0]   # [1, TB]
    o_ref[...] = out.astype(o_ref.dtype)


def _choose_tb(B, D, vmem_budget_bytes=24 * 1024 * 1024):
    """Largest lane tile (multiple of 128, capped at 2048) keeping the
    double-buffered x^T tile + resident params under a budget that is safe
    even for v7x's smaller scoped VMEM."""
    per_col_bytes = 2 * D * 4                      # double-buffered f32 x^T columns
    avail = max(vmem_budget_bytes - D * D * 4, 128 * per_col_bytes)
    tb = min(2048, (avail // per_col_bytes // 128) * 128)
    return max(int(tb), 128)


def rbf_network_forward(x, centres, log_sigmas, lin_w, lin_b, *, tb=None):
    B, D = x.shape
    assert centres.shape == (D, D)

    # ---- parameter-only precomputation, hoisted out of the per-tile path ----
    s = jnp.exp(-2.0 * log_sigmas).astype(jnp.float32)                          # [D]  = 1/sigma^2
    cs = (centres.astype(jnp.float32) * (2.0 * s)[:, None])                     # [D, D] pre-scaled
    a_col = (jnp.sum(centres.astype(jnp.float32) ** 2, axis=1) * s)[:, None]    # [D, 1]
    s_col = s[:, None]                                                          # [D, 1]
    w_col = lin_w.reshape(D, 1).astype(jnp.float32)                             # [D, 1]
    b2d = lin_b.reshape(1, 1).astype(jnp.float32)                               # [1, 1] -> SMEM

    # ---- batch-on-lanes layout: x^T is [D, B] ----
    xT = x.astype(jnp.float32).T                                                # [D, B]

    if tb is None:
        tb = _choose_tb(B, D)
    if B <= tb:
        # Single tile: block equals the full array, no 128-alignment needed.
        tb = B
        b_pad = B
    else:
        assert tb % 128 == 0, "lane tile must be a multiple of 128 when tiling"
        b_pad = pl.cdiv(B, tb) * tb
        xT = jnp.pad(xT, ((0, 0), (0, b_pad - B)))

    grid = (b_pad // tb,)

    out_t = pl.pallas_call(
        rbf_network_kernel,
        out_shape=jax.ShapeDtypeStruct((1, b_pad), jnp.float32),
        grid=grid,
        in_specs=[
            pl.BlockSpec((D, tb), lambda i: (0, i)),            # x^T tile (streams)
            pl.BlockSpec((D, D), lambda i: (0, 0)),             # pre-scaled centres (resident)
            pl.BlockSpec((D, 1), lambda i: (0, 0)),             # a = s*||c||^2
            pl.BlockSpec((D, 1), lambda i: (0, 0)),             # s = 1/sigma^2
            pl.BlockSpec((D, 1), lambda i: (0, 0)),             # linear weight
            pl.BlockSpec(memory_space=pltpu.MemorySpace.SMEM),  # bias scalar
        ],
        out_specs=pl.BlockSpec((1, tb), lambda i: (0, i)),      # lane-dense output slab
        compiler_params=pltpu.CompilerParams(
            dimension_semantics=("parallel",),                  # shard batch tiles across TCs
        ),
    )(xT, cs, a_col, s_col, w_col, b2d)

    return out_t[:, :B].reshape(B, 1)


def rbf_network_reference(x, centres, log_sigmas, lin_w, lin_b):
    # Pure-JAX reference mirroring the PyTorch broadcasting formulation.
    diff = x[:, None, :] - centres[None, :, :]          # [B, D, D]
    dist = jnp.sqrt(jnp.sum(diff * diff, axis=-1))      # [B, D]
    alpha = dist / jnp.exp(log_sigmas)[None, :]         # [B, D]
    phi = jnp.exp(-(alpha * alpha))                     # [B, D]
    return phi @ lin_w.reshape(-1, 1) + lin_b.reshape(1, 1)


if __name__ == "__main__":
    # Small shapes consistent with the module: batch=8, layer_widths=16.
    B, D = 8, 16
    key = jax.random.PRNGKey(0)
    kx, kc, kw, kb = jax.random.split(key, 4)

    x = jax.random.normal(kx, (B, D), dtype=jnp.float32)

    # Deterministic parameter init (shapes per RBF(layer_widths, layer_widths)
    # and nn.Linear(layer_widths, 1)); sigma=3 keeps phi away from underflow so
    # the comparison is meaningful.
    centres = jax.random.normal(kc, (D, D), dtype=jnp.float32)
    log_sigmas = jnp.full((D,), jnp.log(3.0), dtype=jnp.float32)
    bound = 1.0 / jnp.sqrt(D)
    lin_w = jax.random.uniform(kw, (D,), minval=-bound, maxval=bound, dtype=jnp.float32)
    lin_b = jax.random.uniform(kb, (1,), minval=-bound, maxval=bound, dtype=jnp.float32)

    out = rbf_network_forward(x, centres, log_sigmas, lin_w, lin_b)
    out = jax.block_until_ready(out)
    ref = rbf_network_reference(x, centres, log_sigmas, lin_w, lin_b)
    assert out.shape == (B, 1)
    assert jnp.allclose(out, ref, atol=1e-4, rtol=1e-3)

    # Exercise the batch-tiled (multi-grid-step, padded) path as well.
    B2 = 300
    x2 = jax.random.normal(jax.random.PRNGKey(1), (B2, D), dtype=jnp.float32)
    out2 = jax.block_until_ready(
        rbf_network_forward(x2, centres, log_sigmas, lin_w, lin_b, tb=128))
    ref2 = rbf_network_reference(x2, centres, log_sigmas, lin_w, lin_b)
    assert out2.shape == (B2, 1)
    assert jnp.allclose(out2, ref2, atol=1e-4, rtol=1e-3)

    print("KERNEL_OK")
</pallas_src>

<mosaic_0001>
module attributes {stable_mosaic.version = 11 : i64} {
  func.func @rbf_network_kernel(%arg0: i32, %arg1: memref<16x8xf32, #tpu.memory_space<vmem>>, %arg2: memref<16x16xf32, #tpu.memory_space<vmem>>, %arg3: memref<16x1xf32, #tpu.memory_space<vmem>>, %arg4: memref<16x1xf32, #tpu.memory_space<vmem>>, %arg5: memref<16x1xf32, #tpu.memory_space<vmem>>, %arg6: memref<1x1xf32, #tpu.memory_space<smem>>, %arg7: memref<1x8xf32, #tpu.memory_space<vmem>>) attributes {dimension_semantics = [#tpu.dimension_semantics<parallel>], iteration_bounds = array<i64: 1>, scalar_prefetch = 0 : i64, scratch_operands = 0 : i64, tpu.core_type = #tpu.core_type<tc>, window_params = [{transform_indices = @transform_0, window_bounds = array<i64: 16, 8>}, {pipeline_mode = #tpu.pipeline_mode<synchronous>, transform_indices = @transform_1, window_bounds = array<i64: 16, 16>}, {pipeline_mode = #tpu.pipeline_mode<synchronous>, transform_indices = @transform_2, window_bounds = array<i64: 16, 1>}, {pipeline_mode = #tpu.pipeline_mode<synchronous>, transform_indices = @transform_3, window_bounds = array<i64: 16, 1>}, {pipeline_mode = #tpu.pipeline_mode<synchronous>, transform_indices = @transform_4, window_bounds = array<i64: 16, 1>}, {transform_indices = @transform_5, window_bounds = array<i64: 1, 1>}, {transform_indices = @transform_6, window_bounds = array<i64: 1, 8>}]} {
    %c0 = arith.constant 0 : index
    %c0_0 = arith.constant 0 : index
    %0 = vector.load %arg1[%c0, %c0_0] : memref<16x8xf32, #tpu.memory_space<vmem>>, vector<16x8xf32>
    %1 = arith.mulf %0, %0 : vector<16x8xf32>
    %cst = arith.constant dense<0.000000e+00> : vector<8xf32>
    %2 = vector.multi_reduction <add>, %1, %cst [0] : vector<16x8xf32> to vector<8xf32>
    %3 = vector.shape_cast %2 : vector<8xf32> to vector<1x8xf32>
    %c0_1 = arith.constant 0 : index
    %c0_2 = arith.constant 0 : index
    %4 = vector.load %arg2[%c0_1, %c0_2] : memref<16x16xf32, #tpu.memory_space<vmem>>, vector<16x16xf32>
    %cst_3 = arith.constant dense<0.000000e+00> : vector<16x8xf32>
    %5 = tpu.matmul %4, %0, %cst_3 {dimension_numbers = #tpu.dot_dimension_numbers<[1], [0], [0], [1], [0, 0, 1, 1], [], []>} : vector<16x16xf32>, vector<16x8xf32>, vector<16x8xf32> -> vector<16x8xf32>
    %c0_4 = arith.constant 0 : index
    %c0_5 = arith.constant 0 : index
    %6 = vector.load %arg4[%c0_4, %c0_5] : memref<16x1xf32, #tpu.memory_space<vmem>>, vector<16x1xf32>
    %7 = vector.broadcast %6 : vector<16x1xf32> to vector<16x8xf32>
    %8 = vector.broadcast %3 : vector<1x8xf32> to vector<16x8xf32>
    %9 = arith.mulf %7, %8 : vector<16x8xf32>
    %10 = arith.subf %5, %9 : vector<16x8xf32>
    %c0_6 = arith.constant 0 : index
    %c0_7 = arith.constant 0 : index
    %11 = vector.load %arg3[%c0_6, %c0_7] : memref<16x1xf32, #tpu.memory_space<vmem>>, vector<16x1xf32>
    %12 = vector.broadcast %11 : vector<16x1xf32> to vector<16x8xf32>
    %13 = arith.subf %10, %12 : vector<16x8xf32>
    %cst_8 = arith.constant 0.000000e+00 : f32
    %14 = vector.broadcast %cst_8 : f32 to vector<16x8xf32>
    %15 = arith.minimumf %13, %14 : vector<16x8xf32>
    %16 = math.exp %15 : vector<16x8xf32>
    %c0_9 = arith.constant 0 : index
    %c0_10 = arith.constant 0 : index
    %17 = vector.load %arg5[%c0_9, %c0_10] : memref<16x1xf32, #tpu.memory_space<vmem>>, vector<16x1xf32>
    %18 = vector.broadcast %17 : vector<16x1xf32> to vector<16x8xf32>
    %19 = arith.mulf %16, %18 : vector<16x8xf32>
    %cst_11 = arith.constant dense<0.000000e+00> : vector<8xf32>
    %20 = vector.multi_reduction <add>, %19, %cst_11 [0] : vector<16x8xf32> to vector<8xf32>
    %21 = vector.shape_cast %20 : vector<8xf32> to vector<1x8xf32>
    %c0_12 = arith.constant 0 : index
    %c0_13 = arith.constant 0 : index
    %22 = memref.load %arg6[%c0_12, %c0_13] : memref<1x1xf32, #tpu.memory_space<smem>>
    %23 = vector.broadcast %22 : f32 to vector<1x8xf32>
    %24 = arith.addf %21, %23 : vector<1x8xf32>
    %c0_14 = arith.constant 0 : index
    %c0_15 = arith.constant 0 : index
    %25 = vector.load %arg7[%c0_14, %c0_15] : memref<1x8xf32, #tpu.memory_space<vmem>>, vector<1x8xf32>
    tpu.vector_store %arg7[%c0_14, %c0_15], %24 {strides = array<i32>} : memref<1x8xf32, #tpu.memory_space<vmem>>, vector<1x8xf32>,
    return
  }
  func.func @transform_0(%arg0: i32) -> (i32, i32) {
    %c0_i32 = arith.constant 0 : i32
    %c0_i32_0 = arith.constant 0 : i32
    return %c0_i32, %arg0 : i32, i32
  }
  func.func @transform_1(%arg0: i32) -> (i32, i32) {
    %c0_i32 = arith.constant 0 : i32
    %c0_i32_0 = arith.constant 0 : i32
    %c0_i32_1 = arith.constant 0 : i32
    return %c0_i32, %c0_i32_0 : i32, i32
  }
  func.func @transform_2(%arg0: i32) -> (i32, i32) {
    %c0_i32 = arith.constant 0 : i32
    %c0_i32_0 = arith.constant 0 : i32
    %c0_i32_1 = arith.constant 0 : i32
    return %c0_i32, %c0_i32_0 : i32, i32
  }
  func.func @transform_3(%arg0: i32) -> (i32, i32) {
    %c0_i32 = arith.constant 0 : i32
    %c0_i32_0 = arith.constant 0 : i32
    %c0_i32_1 = arith.constant 0 : i32
    return %c0_i32, %c0_i32_0 : i32, i32
  }
  func.func @transform_4(%arg0: i32) -> (i32, i32) {
    %c0_i32 = arith.constant 0 : i32
    %c0_i32_0 = arith.constant 0 : i32
    %c0_i32_1 = arith.constant 0 : i32
    return %c0_i32, %c0_i32_0 : i32, i32
  }
  func.func @transform_5(%arg0: i32) -> (i32, i32) {
    %c0_i32 = arith.constant 0 : i32
    %c0_i32_0 = arith.constant 0 : i32
    %c0_i32_1 = arith.constant 0 : i32
    return %c0_i32, %c0_i32_0 : i32, i32
  }
  func.func @transform_6(%arg0: i32) -> (i32, i32) {
    %c0_i32 = arith.constant 0 : i32
    %c0_i32_0 = arith.constant 0 : i32
    return %c0_i32, %arg0 : i32, i32
  }
}

</mosaic_0001>

<llo_original>
// kernel: tpu_custom_call.1
$region0: #{tpu_custom_call.1}
  #allocation0 [shape = 'u32[]', space=smem, size = 0x4, offset = 0x4, fixed_abs, tag = 'smem constant byte address 0x4 - core index']
  #allocation1 [shape = 'u32[144,128]{1,0:T(1,128)}', space=vmem, size = 0x12000, scoped, tag = 'internal scratch']
  #allocation2 [shape = 'f32[1,1]{1,0:T(1,128)S(6)}', space=smem, size = 0x200, scoped, tag = 'scoped memory for tpu_custom_call.1']
  %s0 = inlined_call_operand.vmem [shape: f32[16,8], index: 0, kind: input, shape index: {}]
  %s1 = inlined_call_operand.vmem [shape: f32[16,16], index: 1, kind: input, shape index: {}]
  %s2 = inlined_call_operand.vmem [shape: f32[16,1], index: 2, kind: input, shape index: {}]
  %s3 = inlined_call_operand.vmem [shape: f32[16,1], index: 3, kind: input, shape index: {}]
  %s4 = inlined_call_operand.vmem [shape: f32[16,1], index: 4, kind: input, shape index: {}]
  %s5 = inlined_call_operand.<no memory space> [shape: f32[1,1], index: 5, kind: input, shape index: {}]
  %s6 = inlined_call_operand.hbm [shape: f32[1,8], index: 6, kind: output, shape index: {}]
  %s7 = sld [smem:[#allocation0]]
  $region34: #{tpu_custom_call.1} parent=0
    _
  %s9 = ssub.s32 1, %s7
  %s10 = scalar_select 0, %s9, %s7
  %11 = sst [smem:[#allocation2]] %s5
  $region1: #{tpu_custom_call.1} parent=0
    #allocation3 [shape = 'u8[512]{0}', space=vmem, size = 0x400, scoped, tag = 'output window, operand 0, single buffered']
    #allocation4 [shape = 's32[1]{0}', space=sflag, size = 0x4, scoped, tag = 'scoped memory for tpu_custom_call.1']
    %12 = vsyncpa [#allocation4], 0
    // Predicated region
    $region2: #{tpu_custom_call.1} parent=1 // pred_check
      _
    $region3: #{tpu_custom_call.1} parent=1 // pred_check_branch
      %14 = sbr.rel (0) target = $region5
    $region4: #{tpu_custom_call.1} parent=1 // pred_region
      _
    $region5: #{tpu_custom_call.1} parent=1 // pred_fallthru
      _
    // Predicated region
    $region6: #{tpu_custom_call.1} parent=1 // pred_check
      _
    $region7: #{tpu_custom_call.1} parent=1 // pred_check_branch
      %16 = sbr.rel (0) target = $region9
    $region8: #{tpu_custom_call.1} parent=1 // pred_region
      _
    $region9: #{tpu_custom_call.1} parent=1 // pred_fallthru
      _
    // Predicated region
    $region10: #{tpu_custom_call.1} parent=1 // pred_check
      _
    $region11: #{tpu_custom_call.1} parent=1 // pred_check_branch
      %18 = sbr.rel (0) target = $region13
    $region12: #{tpu_custom_call.1} parent=1 // pred_region
      _
    $region13: #{tpu_custom_call.1} parent=1 // pred_fallthru
      _
    // Predicated region
    $region14: #{tpu_custom_call.1} parent=1 // pred_check
      _
    $region15: #{tpu_custom_call.1} parent=1 // pred_check_branch
      %20 = sbr.rel (0) target = $region17
    $region16: #{tpu_custom_call.1} parent=1 // pred_region
      _
    $region17: #{tpu_custom_call.1} parent=1 // pred_fallthru
      _
    // Predicated region
    $region18: #{tpu_custom_call.1} parent=1 // pred_check
      _
    $region19: #{tpu_custom_call.1} parent=1 // pred_check_branch
      %22 = sbr.rel (0) target = $region21
    $region20: #{tpu_custom_call.1} parent=1 // pred_region
      _
    $region21: #{tpu_custom_call.1} parent=1 // pred_fallthru
      _
    // Predicated region
    $region22: #{tpu_custom_call.1} parent=1 // pred_check
      _
    $region23: #{tpu_custom_call.1} parent=1 // pred_check_branch
      %24 = sbr.rel (0) target = $region25
    $region24: #{tpu_custom_call.1} parent=1 // pred_region
      _
    $region25: #{tpu_custom_call.1} parent=1 // pred_fallthru
      _
    %v25 = vld [vmem:[%s0] sm:$0xff]
    %v26 = vld [vmem:[%s0 + $0x8] sm:$0xff]
    %v27 = vmul.f32 %v25, %v25
    %v28 = vmul.f32 %v26, %v26
    %vm29 = vcmask 64512
    %v30 = vsel %vm29, %v27, 0.0
    %v31 = vsel %vm29, %v28, 0.0
    %v32 = vadd.f32 %v30, %v31
    %v33 = vrot.slane %v32, 4
    %v34 = vadd.f32 %v32, %v33
    %v35 = vrot.slane %v34, 2
    %v36 = vadd.f32 %v34, %v35
    %v37 = vrot.slane %v36, 1
    %v38 = vadd.f32 %v36, %v37
    %v39 = vld [vmem:[%s1] sm:$0xff]
    %v40 = vld [vmem:[%s1 + $0x8] sm:$0xff]
    %vm41 = vcmask 130048
    %v43 = vsel %vm41, %v39, 0
    %v46 = vsel %vm41, %v40, 0
    %48 = vmatprep.subr.mxu0 0.0
    %49 = vmatpush1.msra.mxu0 0.0
    %50 = vmatprep.subr.mxu0 0.0
    %51 = vmatpush1.msra.mxu0 0.0
    %52 = vmatprep.subr.mxu0 0.0
    %53 = vmatpush1.msra.mxu0 0.0
    %54 = vmatprep.subr.mxu0 0.0
    %55 = vmatpush1.msra.mxu0 0.0
    %56 = vmatprep.subr.mxu0 0.0
    %57 = vmatpush1.msra.mxu0 0.0
    %58 = vmatprep.subr.mxu0 0.0
    %59 = vmatpush1.msra.mxu0 0.0
    %60 = vmatprep.subr.mxu0 0.0
    %61 = vmatpush1.msra.mxu0 0.0
    %62 = vmatprep.subr.mxu0 0.0
    %63 = vmatpush1.msra.mxu0 0.0
    %64 = vmatprep.subr.mxu0 0.0
    %65 = vmatpush1.msra.mxu0 0.0
    %66 = vmatprep.subr.mxu0 0.0
    %67 = vmatpush1.msra.mxu0 0.0
    %68 = vmatprep.subr.mxu0 0.0
    %69 = vmatpush1.msra.mxu0 0.0
    %70 = vmatprep.subr.mxu0 0.0
    %71 = vmatpush1.msra.mxu0 0.0
    %72 = vmatprep.subr.mxu0 0.0
    %73 = vmatpush1.msra.mxu0 0.0
    %74 = vmatprep.subr.mxu0 0.0
    %75 = vmatpush1.msra.mxu0 0.0
    %76 = vmatprep.subr.mxu0 0.0
    %77 = vmatpush1.msra.mxu0 %v26
    %78 = vmatprep.subr.mxu0 0.0
    %79 = vmatpush1.msra.mxu0 %v25
    %80 = vmatprep.subr.mxu0 0.0
    %81 = vmatpush2.msra.mxu0 0.0
    %82 = vmatprep.subr.mxu0 0.0
    %83 = vmatpush2.msra.mxu0 0.0
    %84 = vmatprep.subr.mxu0 0.0
    %85 = vmatpush2.msra.mxu0 0.0
    %86 = vmatprep.subr.mxu0 0.0
    %87 = vmatpush2.msra.mxu0 0.0
    %88 = vmatprep.subr.mxu0 0.0
    %89 = vmatpush2.msra.mxu0 0.0
    %90 = vmatprep.subr.mxu0 0.0
    %91 = vmatpush2.msra.mxu0 0.0
    %92 = vmatprep.subr.mxu0 0.0
    %93 = vmatpush2.msra.mxu0 0.0
    %94 = vmatprep.subr.mxu0 0.0
    %95 = vmatpush2.msra.mxu0 0.0
    %96 = vmatprep.subr.mxu0 0.0
    %97 = vmatpush2.msra.mxu0 0.0
    %98 = vmatprep.subr.mxu0 0.0
    %99 = vmatpush2.msra.mxu0 0.0
    %100 = vmatprep.subr.mxu0 0.0
    %101 = vmatpush2.msra.mxu0 0.0
    %102 = vmatprep.subr.mxu0 0.0
    %103 = vmatpush2.msra.mxu0 0.0
    %104 = vmatprep.subr.mxu0 0.0
    %105 = vmatpush2.msra.mxu0 0.0
    %106 = vmatprep.subr.mxu0 0.0
    %107 = vmatpush2.msra.mxu0 0.0
    %108 = vmatprep.subr.mxu0 0.0
    %109 = vmatpush2.msra.mxu0 0.0
    %110 = vmatprep.subr.mxu0 0.0
    %111 = vmatpush2.msra.mxu0 0.0
    %112 = vmatprep.mubr.f32.mxu0 0.0
    %113 = vmatmul.mubr.f32.gmra.mxu0 %v43
    %v114 = vpop.f32.mrf.mxu0
    %v115 = vadd.f32 0.0, %v114
    %v116 = vpop.f32.mrf.mxu0
    %117 = vmatprep.mubr.f32.mxu0 0.0
    %118 = vmatmul.mubr.f32.gmra.mxu0 %v46
    %v119 = vpop.f32.mrf.mxu0
    %v120 = vadd.f32 0.0, %v119
    %v121 = vpop.f32.mrf.mxu0
    %122 = vdwg.mxu0
    %v123 = vld [vmem:[%s3] sm:$0xff]
    %v124 = vld [vmem:[%s3 + $0x8] sm:$0xff]
    %126 = vset.pattern.permute.xlu0 0
    %127 = vperm.xlu0 %126, %v123
    %v128 = vpop.permute.xlu0 %127
    %131 = vset.pattern.permute.xlu0 0
    %132 = vperm.xlu0 %131, %v124
    %v133 = vpop.permute.xlu0 %132
    %v135 = vmul.f32 %v128, %v38
    %v136 = vmul.f32 %v133, %v38
    %v137 = vsub.f32 %v115, %v135
    %v138 = vsub.f32 %v120, %v136
    %v139 = vld [vmem:[%s2] sm:$0xff]
    %v140 = vld [vmem:[%s2 + $0x8] sm:$0xff]
    %142 = vset.pattern.permute.xlu0 0
    %143 = vperm.xlu0 %142, %v139
    %v144 = vpop.permute.xlu0 %143
    %147 = vset.pattern.permute.xlu0 0
    %148 = vperm.xlu0 %147, %v140
    %v149 = vpop.permute.xlu0 %148
    %v151 = vsub.f32 %v137, %v144
    %v152 = vsub.f32 %v138, %v149
    %v153 = vmin.f32 %v151, 0.0
    %v154 = vmin.f32 %v152, 0.0
    %v155 = vmul.f32 %v153, 1.442695
    %v156 = vpow.pop %v155
    %v157 = vmul.f32 %v154, 1.442695
    %v158 = vpow.pop %v157
    %v159 = vld [vmem:[%s4] sm:$0xff]
    %v160 = vld [vmem:[%s4 + $0x8] sm:$0xff]
    %162 = vset.pattern.permute.xlu0 0
    %163 = vperm.xlu0 %162, %v159
    %v164 = vpop.permute.xlu0 %163
    %167 = vset.pattern.permute.xlu0 0
    %168 = vperm.xlu0 %167, %v160
    %v169 = vpop.permute.xlu0 %168
    %v171 = vmul.f32 %v156, %v164
    %v172 = vmul.f32 %v158, %v169
    %v173 = vsel %vm29, %v171, 0.0
    %v174 = vsel %vm29, %v172, 0.0
    %v175 = vadd.f32 %v173, %v174
    %v176 = vrot.slane %v175, 4
    %v177 = vadd.f32 %v175, %v176
    %v178 = vrot.slane %v177, 2
    %v179 = vadd.f32 %v177, %v178
    %v180 = vrot.slane %v179, 1
    %v181 = vadd.f32 %v179, %v180
    %s182 = sld [smem:[#allocation2]]
    %v183 = vstv %s182
    %v184 = vadd.f32 %v181, %v183
    %vm185 = vcmask 57344
    %186 = vst.msk [vmem:[#allocation3] sm:$0x1] %vm185, %v184
    // Predicated region
    $region26: #{tpu_custom_call.1} parent=1 // pred_check
      _
    $region27: #{tpu_custom_call.1} parent=1 // pred_check_branch
      %188 = sbr.rel (0) target = $region29
    $region28: #{tpu_custom_call.1} parent=1 // pred_region
      %s190 = ssub.s32 16, 16
      %191 = vsyncadd [#allocation4], %s190
      %s193 = sshll.u32 [#allocation3], 4
      %s194 = int_to_ptr.vmem [resolvable:$true] %s193
      %196 = dma.vmem_to_hbm [thread:$0]  %s194, 16, %s6, [#allocation4]
    $region29: #{tpu_custom_call.1} parent=1 // pred_fallthru
      _
    // Predicated region
    $region30: #{tpu_custom_call.1} parent=1 // pred_check
      _
    $region31: #{tpu_custom_call.1} parent=1 // pred_check_branch
      %198 = sbr.rel (0) target = $region33
    $region32: #{tpu_custom_call.1} parent=1 // pred_region
      %199 = dma.done [#allocation4], 16
    $region33: #{tpu_custom_call.1} parent=1 // pred_fallthru
      _
    %200 = vsyncpa [#allocation4], 1

</llo_original>
